<compile_context>
chip_gen: v7x
topology: tpu7x:2x2x1
jax: 0.10.0
libtpu: 0.0.40
codegen_flags: <defaults>
</compile_context>

<pallas_src>
import jax
import jax.numpy as jnp
from jax.experimental import pallas as pl
from jax.experimental.pallas import tpu as pltpu


def _round_up(n, m):
    return ((n + m - 1) // m) * m


# ----------------------------------------------------------------------------
# Kernel 1: trans_ff(x) — gridded weight stream over the vox3 (lane) axis.
# ----------------------------------------------------------------------------
def trans_kernel(x_ref, wt_ref, bt_ref, trans_ref):
    # bf16 x bf16 -> f32 accumulate on the MXU; bias add in f32.
    acc = jnp.dot(x_ref[...], wt_ref[...], preferred_element_type=jnp.float32)
    trans_ref[...] = acc + bt_ref[...]


# ----------------------------------------------------------------------------
# Kernel 2: dense0 -> dense1 -> rot_grip_collision_ff (tiny, runs once).
# ----------------------------------------------------------------------------
def rgc_kernel(x_ref, w0_ref, b0_ref, w1_ref, b1_ref, w2_ref, b2_ref, rgc_ref):
    x = x_ref[...]

    h0 = jnp.dot(x, w0_ref[...], preferred_element_type=jnp.float32) + b0_ref[...]
    h0 = jnp.maximum(h0, 0.0)

    h1 = (jnp.dot(h0.astype(jnp.bfloat16), w1_ref[...],
                  preferred_element_type=jnp.float32) + b1_ref[...])
    h1 = jnp.maximum(h1, 0.0)

    rgc_ref[...] = (jnp.dot(h1.astype(jnp.bfloat16), w2_ref[...],
                            preferred_element_type=jnp.float32) + b2_ref[...])


# ----------------------------------------------------------------------------
# One-time weight preparation (hoisted out of the forward).
# ----------------------------------------------------------------------------
def _choose_tn(final_dim, vox3, tn=None, target_tile_bytes=4 << 20, min_tiles=8):
    """Lane-width of each streamed wt tile (multiple of 128)."""
    vox3_128 = _round_up(vox3, 128)
    if tn is None:
        # ~4 MiB bf16 weight tile amortizes per-grid-step overhead.
        tn = max(128, (target_tile_bytes // (final_dim * 2)) // 128 * 128)
        # keep >= min_tiles grid steps so the "parallel" axis feeds both
        # TensorCores on v7x (and the pipeline stays deep).
        if vox3_128 // 128 >= min_tiles:
            tn = min(tn, max(128, (vox3_128 // min_tiles) // 128 * 128))
    else:
        tn = max(128, _round_up(tn, 128))
    tn = min(tn, vox3_128)
    # Prefer a TN that divides vox3 exactly -> no output padding, no slice
    # copy, and the (B, vox3) -> (B, vox, vox, vox) reshape stays a view.
    for cand in range(tn, 127, -128):
        if vox3 % cand == 0:
            return cand
    return tn


def prepare_params(params, *, voxel_size, num_collision_classes, tn=None):
    """Cast/pad weights ONCE (bf16 stream + TN-aligned padding)."""
    wt, bt, w0, b0, w1, b1, w2, b2 = params
    final_dim, vox3 = wt.shape
    assert vox3 == voxel_size ** 3
    rgc_dim = w2.shape[1]

    TN = _choose_tn(final_dim, vox3, tn=tn)
    vox3_pad = _round_up(vox3, TN)

    wt_bf = wt.astype(jnp.bfloat16)
    bt_p = bt
    if vox3_pad != vox3:
        wt_bf = jnp.pad(wt_bf, ((0, 0), (0, vox3_pad - vox3)))
        bt_p = jnp.pad(bt, ((0, 0), (0, vox3_pad - vox3)))

    rgc_pad = _round_up(rgc_dim, 128)
    w2_bf = w2.astype(jnp.bfloat16)
    b2_p = b2
    if rgc_pad != rgc_dim:
        w2_bf = jnp.pad(w2_bf, ((0, 0), (0, rgc_pad - rgc_dim)))
        b2_p = jnp.pad(b2, ((0, 0), (0, rgc_pad - rgc_dim)))

    return dict(
        wt=wt_bf, bt=bt_p,
        w0=w0.astype(jnp.bfloat16), b0=b0,
        w1=w1.astype(jnp.bfloat16), b1=b1,
        w2=w2_bf, b2=b2_p,
        voxel_size=voxel_size, vox3=vox3, vox3_pad=vox3_pad,
        final_dim=final_dim, rgc_dim=rgc_dim, rgc_pad=rgc_pad,
        num_collision_classes=num_collision_classes, tn=TN,
    )


# ----------------------------------------------------------------------------
# Forward
# ----------------------------------------------------------------------------
def qattn_forward(x, prepared):
    B, feature_dim = x.shape
    final_dim = prepared["final_dim"]
    assert feature_dim == final_dim, (
        "QAttn forward applies trans_ff (in-dim=final_dim) to x (dim=feature_dim); "
        f"require feature_dim == final_dim, got {feature_dim} vs {final_dim}")

    TN = prepared["tn"]
    vox3 = prepared["vox3"]
    vox3_pad = prepared["vox3_pad"]
    voxel_size = prepared["voxel_size"]
    n_tiles = vox3_pad // TN

    # Only the tiny activation is cast per call; all weights were prepared once.
    x_bf = x.astype(jnp.bfloat16)

    # VMEM budget: double-buffered wt tile + f32 out block + bias, resident x.
    b_sub = max(B, 8)
    vmem_needed = (2 * final_dim * TN * 2                      # wt  (bf16)
                   + 2 * b_sub * TN * 4                        # out (f32)
                   + 2 * 8 * TN * 4                            # bias (f32)
                   + 2 * b_sub * _round_up(feature_dim, 128) * 2)  # x (bf16)
    vmem_limit = int(min(max(2 * vmem_needed, 32 << 20), 48 << 20))

    # ---------------- trans_ff: grid over vox3 ----------------
    trans = pl.pallas_call(
        trans_kernel,
        out_shape=jax.ShapeDtypeStruct((B, vox3_pad), jnp.float32),
        grid=(n_tiles,),
        in_specs=[
            pl.BlockSpec((B, feature_dim), lambda j: (0, 0)),   # x: resident
            pl.BlockSpec((final_dim, TN), lambda j: (0, j)),    # wt tile stream
            pl.BlockSpec((1, TN), lambda j: (0, j)),            # bias tile
        ],
        out_specs=pl.BlockSpec((B, TN), lambda j: (0, j)),
        compiler_params=pltpu.CompilerParams(
            dimension_semantics=("parallel",),                  # 2 TCs on v7x
            vmem_limit_bytes=vmem_limit),
        cost_estimate=pl.CostEstimate(
            flops=2 * B * final_dim * vox3_pad,
            transcendentals=0,
            bytes_accessed=(final_dim * vox3_pad * 2            # wt (bf16)
                            + B * feature_dim * 2               # x  (bf16)
                            + (B + 1) * vox3_pad * 4)),         # out + bias
    )(x_bf, prepared["wt"], prepared["bt"])
    if vox3_pad != vox3:   # only when no TN divides vox3 (rare) — extra copy
        trans = trans[:, :vox3]
    trans = trans.reshape(-1, voxel_size, voxel_size, voxel_size)

    # ---------------- dense0 -> dense1 -> rgc (tiny, run once) ----------------
    vmem = pl.BlockSpec(memory_space=pltpu.MemorySpace.VMEM)
    rgc = pl.pallas_call(
        rgc_kernel,
        out_shape=jax.ShapeDtypeStruct((B, prepared["rgc_pad"]), jnp.float32),
        in_specs=[vmem] * 7,
        out_specs=vmem,
    )(x_bf, prepared["w0"], prepared["b0"], prepared["w1"], prepared["b1"],
      prepared["w2"], prepared["b2"])
    rgc = rgc[:, :prepared["rgc_dim"]]

    ncc = prepared["num_collision_classes"]
    rot_and_grip_out = rgc[:, :-ncc]
    collision_out = rgc[:, -ncc:]
    return trans, rot_and_grip_out, collision_out


# ----------------------------------------------------------------------------
# Parameter construction + pure-JAX reference
# ----------------------------------------------------------------------------
def init_params(key, feature_dim, final_dim, voxel_size,
                num_rotation_classes, num_grip_classes, num_collision_classes):
    """Deterministic synthetic parameters; shapes match the nn.Linear layers."""
    vox3 = voxel_size ** 3
    rgc_dim = num_rotation_classes * 3 + num_grip_classes + num_collision_classes
    dims = [
        (final_dim, vox3),      # trans_ff   (declared in-dim = final_dim)
        (feature_dim, 256),     # dense0
        (256, final_dim),       # dense1
        (final_dim, rgc_dim),   # rot_grip_collision_ff
    ]
    keys = jax.random.split(key, 2 * len(dims))
    params = []
    for i, (din, dout) in enumerate(dims):
        w = jax.random.normal(keys[2 * i], (din, dout), jnp.float32) * (1.0 / jnp.sqrt(din))
        b = jax.random.normal(keys[2 * i + 1], (1, dout), jnp.float32) * 0.01
        params.extend([w, b])
    return tuple(params)


def reference_forward(x, params, *, voxel_size, num_collision_classes):
    """Pure-JAX f32 reference for a sanity check."""
    wt, bt, w0, b0, w1, b1, w2, b2 = params
    trans = x @ wt + bt
    h0 = jnp.maximum(x @ w0 + b0, 0.0)
    h1 = jnp.maximum(h0 @ w1 + b1, 0.0)
    rgc = h1 @ w2 + b2
    return (trans.reshape(-1, voxel_size, voxel_size, voxel_size),
            rgc[:, :-num_collision_classes],
            rgc[:, -num_collision_classes:])


if __name__ == "__main__":
    # Small, self-consistent configuration.
    B = 2
    feature_dim = 64
    final_dim = 64          # == feature_dim (see NOTE above)
    voxel_size = 8          # vox3 = 512
    num_rotation_classes = 72
    num_grip_classes = 2
    num_collision_classes = 2

    key = jax.random.PRNGKey(0)
    pkey, xkey = jax.random.split(key)
    params = init_params(pkey, feature_dim, final_dim, voxel_size,
                         num_rotation_classes, num_grip_classes, num_collision_classes)
    x = jax.random.normal(xkey, (B, feature_dim), jnp.float32)

    # One-time weight prep (cast + pad hoisted out of the forward).
    # tn=128 so the toy vox3=512 still exercises a multi-step grid; at
    # production vox3 leave tn=None for the ~4 MiB auto-sized tiles.
    prepared = prepare_params(params, voxel_size=voxel_size,
                              num_collision_classes=num_collision_classes, tn=128)
    jax.block_until_ready(prepared["wt"])

    trans, rot_and_grip_out, collision_out = qattn_forward(x, prepared)
    jax.block_until_ready((trans, rot_and_grip_out, collision_out))

    # Verify against the pure-f32 reference (bf16 weights/inputs, f32 accumulate
    # -> loosened tolerances vs. the original 1e-4).
    t_ref, r_ref, c_ref = reference_forward(
        x, params, voxel_size=voxel_size, num_collision_classes=num_collision_classes)
    assert trans.shape == (B, voxel_size, voxel_size, voxel_size)
    assert rot_and_grip_out.shape == (B, num_rotation_classes * 3 + num_grip_classes)
    assert collision_out.shape == (B, num_collision_classes)
    assert jnp.allclose(trans, t_ref, atol=5e-2, rtol=5e-2)
    assert jnp.allclose(rot_and_grip_out, r_ref, atol=5e-2, rtol=5e-2)
    assert jnp.allclose(collision_out, c_ref, atol=5e-2, rtol=5e-2)

    print("KERNEL_OK")
</pallas_src>

<mosaic_0001>
module attributes {stable_mosaic.version = 11 : i64} {
  func.func @trans_kernel(%arg0: i32, %arg1: memref<2x64xbf16, #tpu.memory_space<vmem>>, %arg2: memref<64x128xbf16, #tpu.memory_space<vmem>>, %arg3: memref<1x128xf32, #tpu.memory_space<vmem>>, %arg4: memref<2x128xf32, #tpu.memory_space<vmem>>) attributes {dimension_semantics = [#tpu.dimension_semantics<parallel>], iteration_bounds = array<i64: 4>, scalar_prefetch = 0 : i64, scratch_operands = 0 : i64, tpu.core_type = #tpu.core_type<tc>, window_params = [{pipeline_mode = #tpu.pipeline_mode<synchronous>, transform_indices = @transform_0, window_bounds = array<i64: 2, 64>}, {transform_indices = @transform_1, window_bounds = array<i64: 64, 128>}, {transform_indices = @transform_2, window_bounds = array<i64: 1, 128>}, {transform_indices = @transform_3, window_bounds = array<i64: 2, 128>}]} {
    %c0 = arith.constant 0 : index
    %c0_0 = arith.constant 0 : index
    %0 = vector.load %arg1[%c0, %c0_0] : memref<2x64xbf16, #tpu.memory_space<vmem>>, vector<2x64xbf16>
    %c0_1 = arith.constant 0 : index
    %c0_2 = arith.constant 0 : index
    %1 = vector.load %arg2[%c0_1, %c0_2] : memref<64x128xbf16, #tpu.memory_space<vmem>>, vector<64x128xbf16>
    %cst = arith.constant dense<0.000000e+00> : vector<2x128xf32>
    %2 = tpu.matmul %0, %1, %cst {dimension_numbers = #tpu.dot_dimension_numbers<[1], [0], [0], [1], [0, 0, 1, 1], [], []>} : vector<2x64xbf16>, vector<64x128xbf16>, vector<2x128xf32> -> vector<2x128xf32>
    %c0_3 = arith.constant 0 : index
    %c0_4 = arith.constant 0 : index
    %3 = vector.load %arg3[%c0_3, %c0_4] : memref<1x128xf32, #tpu.memory_space<vmem>>, vector<1x128xf32>
    %4 = vector.broadcast %3 : vector<1x128xf32> to vector<2x128xf32>
    %5 = arith.addf %2, %4 : vector<2x128xf32>
    %c0_5 = arith.constant 0 : index
    %c0_6 = arith.constant 0 : index
    %6 = vector.load %arg4[%c0_5, %c0_6] : memref<2x128xf32, #tpu.memory_space<vmem>>, vector<2x128xf32>
    tpu.vector_store %arg4[%c0_5, %c0_6], %5 {strides = array<i32>} : memref<2x128xf32, #tpu.memory_space<vmem>>, vector<2x128xf32>,
    return
  }
  func.func @transform_0(%arg0: i32) -> (i32, i32) {
    %c0_i32 = arith.constant 0 : i32
    %c0_i32_0 = arith.constant 0 : i32
    %c0_i32_1 = arith.constant 0 : i32
    return %c0_i32, %c0_i32_0 : i32, i32
  }
  func.func @transform_1(%arg0: i32) -> (i32, i32) {
    %c0_i32 = arith.constant 0 : i32
    %c0_i32_0 = arith.constant 0 : i32
    return %c0_i32, %arg0 : i32, i32
  }
  func.func @transform_2(%arg0: i32) -> (i32, i32) {
    %c0_i32 = arith.constant 0 : i32
    %c0_i32_0 = arith.constant 0 : i32
    return %c0_i32, %arg0 : i32, i32
  }
  func.func @transform_3(%arg0: i32) -> (i32, i32) {
    %c0_i32 = arith.constant 0 : i32
    %c0_i32_0 = arith.constant 0 : i32
    return %c0_i32, %arg0 : i32, i32
  }
}

</mosaic_0001>

<llo_original>
// kernel: tpu_custom_call.1
$region0: #{tpu_custom_call.1}
  #allocation0 [shape = 'u32[]', space=smem, size = 0x4, offset = 0x4, fixed_abs, tag = 'smem constant byte address 0x4 - core index']
  #allocation1 [shape = 'u32[144,128]{1,0:T(1,128)}', space=vmem, size = 0x12000, scoped, tag = 'internal scratch']
  %s0 = inlined_call_operand.hbm [shape: bf16[2,64], index: 0, kind: input, shape index: {}]
  %s1 = inlined_call_operand.hbm [shape: bf16[64,512], index: 1, kind: input, shape index: {}]
  %s2 = inlined_call_operand.vmem [shape: f32[1,512], index: 2, kind: input, shape index: {}]
  %s3 = inlined_call_operand.hbm [shape: f32[2,512], index: 3, kind: output, shape index: {}]
  %s4 = sld [smem:[#allocation0]]
  $region53: #{tpu_custom_call.1} parent=0
    _
  %s6 = ssub.s32 1, %s4
  %s7 = scalar_select 0, %s6, %s4
  $region1: #{tpu_custom_call.1} parent=0
    #allocation2 [shape = 'u8[512]{0}', space=vmem, size = 0x400, scoped, tag = 'input window, operand 0, single buffered']
    #allocation3 [shape = 's32[2]{0}', space=sflag, size = 0x8, scoped, tag = 'scoped memory for tpu_custom_call.1']
    #allocation4 [shape = 's32[2]{0}', space=sflag, size = 0x8, scoped, tag = 'scoped memory for tpu_custom_call.1']
    #allocation5 [shape = 'u8[32768]{0}', space=vmem, size = 0x8000, scoped, tag = 'input window, operand 1']
    #allocation6 [shape = 's32[2]{0}', space=sflag, size = 0x8, scoped, tag = 'scoped memory for tpu_custom_call.1']
    #allocation7 [shape = 'u8[2048]{0}', space=vmem, size = 0x800, scoped, tag = 'output window, operand 0']
    %8 = vsyncpa [#allocation3], 0
    %9 = vsyncpa [#allocation6], 0
    %s10 = scalar_lea.sflag [#allocation6], 1
    %11 = vsyncpa %s10, 0
    %12 = vsyncpa [#allocation4], 0
    %s13 = scalar_lea.sflag [#allocation4], 1
    %14 = vsyncpa %s13, 0
    loop: start=0, step=1, limit=6
    $region2: #{tpu_custom_call.1} parent=1 // loop_pre_header
      _
    $region3: #{tpu_custom_call.1} parent=1 // loop_header
      %s16 = sphi 0, %s20
      %p17 = scmp.ge.s32.totalorder %s16, 6
      %s24 = sphi 0, %s24
      %s26 = sphi 0, %s24
      %s27 = sphi 0, %s26
      %s41 = sphi 0, %s27
      %s47 = sphi 0, %s49
      %s50 = sphi 0, %s47
      %s51 = sphi 0, %s50
      %s67 = sphi 0, %s51
      %s73 = sphi 0, %s75
      %s76 = sphi 0, %s73
      %s77 = sphi 0, %s76
      %s93 = sphi 0, %s77
      %s99 = sphi 0, %s101
      %s102 = sphi 0, %s99
      %s103 = sphi 0, %s102
      %s119 = sphi 0, %s103
    $region4: #{tpu_custom_call.1} parent=1 // loop_header_branch
      %19 = sbr.rel (%p17) target = $region8
    $region5: #{tpu_custom_call.1} parent=1 // loop_body
      %s21 = ssub.s32 %s16, 1
      %s22 = ssub.s32 %s16, 2
      %s23 = sadd.s32 %s16, 1
      %s25 = sadd.s32 %s24, 1
      %p28 = scmp.eq.s32.totalorder %s16, 3
      %p29 = scmp.ne.s32.totalorder %s24, %s26
      %p30 = scmp.eq.s32.totalorder %s16, 0
      %p31 = por %p29, %p30
      %p32 = scmp.ne.s32.totalorder %s24, %s26
      %p33 = scmp.eq.s32.totalorder %s21, 3
      %p34 = por %p32, %p33
      %p35 = scmp.ne.s32.totalorder %s26, %s27
      %p36 = scmp.eq.s32.totalorder %s21, 0
      %p37 = por %p35, %p36
      %p38 = scmp.ne.s32.totalorder %s26, %s27
      %p39 = scmp.eq.s32.totalorder %s22, 3
      %p40 = por %p38, %p39
      %p42 = scmp.ne.s32.totalorder %s27, %s41
      %p43 = scmp.eq.s32.totalorder %s22, 0
      %p44 = por %p42, %p43
      %s45 = ssub.s32 %s16, %s23
      %p46 = scmp.eq.s32.totalorder %s45, 0
      %s48 = sadd.s32 %s47, 1
      %s49 = scalar_select %p46, %s47, %s48
      %p52 = pneg %p46
      %p53 = scmp.eq.s32.totalorder %s16, 3
      %p54 = por %p52, %p53
      %p55 = scmp.ne.s32.totalorder %s47, %s50
      %p56 = scmp.eq.s32.totalorder %s16, 0
      %p57 = por %p55, %p56
      %p58 = scmp.ne.s32.totalorder %s47, %s50
      %p59 = scmp.eq.s32.totalorder %s21, 3
      %p60 = por %p58, %p59
      %p61 = scmp.ne.s32.totalorder %s50, %s51
      %p62 = scmp.eq.s32.totalorder %s21, 0
      %p63 = por %p61, %p62
      %p64 = scmp.ne.s32.totalorder %s50, %s51
      %p65 = scmp.eq.s32.totalorder %s22, 3
      %p66 = por %p64, %p65
      %p68 = scmp.ne.s32.totalorder %s51, %s67
      %p69 = scmp.eq.s32.totalorder %s22, 0
      %p70 = por %p68, %p69
      %s71 = ssub.s32 %s16, %s23
      %p72 = scmp.eq.s32.totalorder %s71, 0
      %s74 = sadd.s32 %s73, 1
      %s75 = scalar_select %p72, %s73, %s74
      %p78 = pneg %p72
      %p79 = scmp.eq.s32.totalorder %s16, 3
      %p80 = por %p78, %p79
      %p81 = scmp.ne.s32.totalorder %s73, %s76
      %p82 = scmp.eq.s32.totalorder %s16, 0
      %p83 = por %p81, %p82
      %p84 = scmp.ne.s32.totalorder %s73, %s76
      %p85 = scmp.eq.s32.totalorder %s21, 3
      %p86 = por %p84, %p85
      %p87 = scmp.ne.s32.totalorder %s76, %s77
      %p88 = scmp.eq.s32.totalorder %s21, 0
      %p89 = por %p87, %p88
      %p90 = scmp.ne.s32.totalorder %s76, %s77
      %p91 = scmp.eq.s32.totalorder %s22, 3
      %p92 = por %p90, %p91
      %p94 = scmp.ne.s32.totalorder %s77, %s93
      %p95 = scmp.eq.s32.totalorder %s22, 0
      %p96 = por %p94, %p95
      %s97 = ssub.s32 %s16, %s23
      %p98 = scmp.eq.s32.totalorder %s97, 0
      %s100 = sadd.s32 %s99, 1
      %s101 = scalar_select %p98, %s99, %s100
      %p104 = pneg %p98
      %p105 = scmp.eq.s32.totalorder %s16, 3
      %p106 = por %p104, %p105
      %p107 = scmp.ne.s32.totalorder %s99, %s102
      %p108 = scmp.eq.s32.totalorder %s16, 0
      %p109 = por %p107, %p108
      %p110 = scmp.ne.s32.totalorder %s99, %s102
      %p111 = scmp.eq.s32.totalorder %s21, 3
      %p112 = por %p110, %p111
      %p113 = scmp.ne.s32.totalorder %s102, %s103
      %p114 = scmp.eq.s32.totalorder %s21, 0
      %p115 = por %p113, %p114
      %p116 = scmp.ne.s32.totalorder %s102, %s103
      %p117 = scmp.eq.s32.totalorder %s22, 3
      %p118 = por %p116, %p117
      %p120 = scmp.ne.s32.totalorder %s103, %s119
      %p121 = scmp.eq.s32.totalorder %s22, 0
      %p122 = por %p120, %p121
      %p123 = scmp.le.s32.totalorder 1, %s16
      %p124 = scmp.lt.s32.totalorder %s16, 5
      %p125 = pnand %p123, %p124
      %p126 = pneg %p125
      // Predicated region
      $region9: #{tpu_custom_call.1} parent=5 // pred_check
        _
      $region10: #{tpu_custom_call.1} parent=5 // pred_check_branch
        %128 = sbr.rel (%p125) target = $region12
      $region11: #{tpu_custom_call.1} parent=5 // pred_region
        %s129 = ssub.s32 %s16, 1
        // Predicated region
        $region13: #{tpu_custom_call.1} parent=11 // pred_check
          %p130 = pneg %p37
        $region14: #{tpu_custom_call.1} parent=11 // pred_check_branch
          %132 = sbr.rel (%p130) target = $region16
        $region15: #{tpu_custom_call.1} parent=11 // pred_region
          %s134 = ssub.s32 16, 16
          %135 = vsyncadd [#allocation3], %s134
          %s137 = sshll.u32 [#allocation2], 4
          %s138 = int_to_ptr.vmem [resolvable:$true] %s137
          %140 = dma.hbm_to_vmem [thread:$0]  %s0, 16, %s138, [#allocation3]
        $region16: #{tpu_custom_call.1} parent=11 // pred_fallthru
          _
      $region12: #{tpu_custom_call.1} parent=5 // pred_fallthru
        _
      %p141 = scmp.lt.s32.totalorder %s16, 4
      // Predicated region
      $region17: #{tpu_custom_call.1} parent=5 // pred_check
        %p142 = pneg %p141
      $region18: #{tpu_custom_call.1} parent=5 // pred_check_branch
        %144 = sbr.rel (%p142) target = $region20
      $region19: #{tpu_custom_call.1} parent=5 // pred_region
        // Predicated region
        $region21: #{tpu_custom_call.1} parent=19 // pred_check
          %p145 = pneg %p57
        $region22: #{tpu_custom_call.1} parent=19 // pred_check_branch
          %147 = sbr.rel (%p145) target = $region24
        $region23: #{tpu_custom_call.1} parent=19 // pred_region
          %s148 = sand.u32 %s47, 1
          %s149 = scalar_lea.sflag [#allocation6], %s148
          %s150 = sand.u32 %s47, 1
          %s151 = smul.addr %s150, 32
          %s152 = scalar_lea.vmem [#allocation5], %s151
          %s154 = ssub.s32 512, 512
          %155 = vsyncadd %s149, %s154
          %s156 = smul.addr %s16, 64
          %s157 = scalar_lea.hbm %s1, %s156
          %s158 = sshll.u32 %s152, 4
          %s159 = int_to_ptr.vmem [resolvable:$true] %s158
          %164 = dma.hbm_to_vmem [thread:$0]  %s157, 512, %s159, %s149, 256, 64, 4
        $region24: #{tpu_custom_call.1} parent=19 // pred_fallthru
          _
        // Predicated region
        $region25: #{tpu_custom_call.1} parent=19 // pred_check
          %p165 = pneg %p83
        $region26: #{tpu_custom_call.1} parent=19 // pred_check_branch
          %167 = sbr.rel (%p165) target = $region28
        $region27: #{tpu_custom_call.1} parent=19 // pred_region
          %p168 = scmp.lt.s32.totalorder %s16, 3
          %s169 = scalar_select %p168, %s16, 3
          %s170 = scalar_lea.vmem %s2, %s169
        $region28: #{tpu_custom_call.1} parent=19 // pred_fallthru
          _
      $region20: #{tpu_custom_call.1} parent=5 // pred_fallthru
        _
      %p171 = scmp.le.s32.totalorder 1, %s16
      %p172 = scmp.lt.s32.totalorder %s16, 5
      %p173 = pnand %p171, %p172
      %p174 = pneg %p173
      // Predicated region
      $region29: #{tpu_custom_call.1} parent=5 // pred_check
        _
      $region30: #{tpu_custom_call.1} parent=5 // pred_check_branch
        %176 = sbr.rel (%p173) target = $region32
      $region31: #{tpu_custom_call.1} parent=5 // pred_region
        %s177 = ssub.s32 %s16, 1
        // Predicated region
        $region33: #{tpu_custom_call.1} parent=31 // pred_check
          %p178 = pneg %p37
        $region34: #{tpu_custom_call.1} parent=31 // pred_check_branch
          %180 = sbr.rel (%p178) target = $region36
        $region35: #{tpu_custom_call.1} parent=31 // pred_region
          %181 = dma.done [#allocation3], 16
        $region36: #{tpu_custom_call.1} parent=31 // pred_fallthru
          _
        %s182 = sand.u32 %s50, 1
        %s183 = scalar_lea.sflag [#allocation6], %s182
        %s184 = sand.u32 %s50, 1
        %s185 = smul.addr %s184, 32
        %s186 = scalar_lea.vmem [#allocation5], %s185
        // Predicated region
        $region37: #{tpu_custom_call.1} parent=31 // pred_check
          %p187 = pneg %p63
        $region38: #{tpu_custom_call.1} parent=31 // pred_check_branch
          %189 = sbr.rel (%p187) target = $region40
        $region39: #{tpu_custom_call.1} parent=31 // pred_region
          %190 = dma.done %s183, 512
        $region40: #{tpu_custom_call.1} parent=31 // pred_fallthru
          _
        %p191 = pneg %p37
        %p192 = pneg %p34
        %s193 = sand.u32 %s50, 1
        %s194 = scalar_lea.sflag [#allocation6], %s193
        %s195 = sand.u32 %s50, 1
        %s196 = smul.addr %s195, 32
        %s197 = scalar_lea.vmem [#allocation5], %s196
        %p198 = pneg %p63
        %p199 = pneg %p60
        %p200 = scmp.lt.s32.totalorder %s21, 3
        %s201 = scalar_select %p200, %s21, 3
        %s202 = scalar_lea.vmem %s2, %s201
        %p203 = pneg %p89
        %p204 = pneg %p86
        %p205 = pneg %p115
        %p206 = pneg %p112
        %s207 = sand.u32 %s102, 1
        %s208 = scalar_lea.sflag [#allocation4], %s207
        %s209 = sand.u32 %s102, 1
        %s210 = smul.addr %s209, 2
        %s211 = scalar_lea.vmem [#allocation7], %s210
        %p212 = scmp.lt.s32.totalorder %s21, 3
        %s213 = scalar_select %p212, %s21, 3
        %s214 = scalar_lea.vmem %s2, %s213
        %v216 = vld [vmem:[#allocation2] sm:$0x1]
        %v217 = vld [vmem:[%s186] sm:$0xf]
        %v218 = vld [vmem:[%s186 + $0x4] sm:$0xf]
        %v219 = vld [vmem:[%s186 + $0x8] sm:$0xf]
        %v220 = vld [vmem:[%s186 + $0xc] sm:$0xf]
        %v221 = vld [vmem:[%s186 + $0x10] sm:$0xf]
        %v222 = vld [vmem:[%s186 + $0x14] sm:$0xf]
        %v223 = vld [vmem:[%s186 + $0x18] sm:$0xf]
        %v224 = vld [vmem:[%s186 + $0x1c] sm:$0xf]
        %v225 = vld [vmem:[%s214] sm:$0x1]
        %v227 = vlaneseq
        %v228 = vshrl.u32 %v227, 7
        %v229 = vsub.s32 0, %v228
        %v230 = vrot.slane %v225, %v229
        %v240 = vunpack.c.l.b16 %v217
        %v241 = vunpack.c.l.b16 %v218
        %v242 = vunpack.c.l.b16 %v219
        %v243 = vunpack.c.l.b16 %v220
        %v244 = vunpack.c.l.b16 %v221
        %v245 = vunpack.c.l.b16 %v222
        %v246 = vunpack.c.l.b16 %v223
        %v247 = vunpack.c.l.b16 %v224
        %v248 = vpack.c.b16 %v241, %v240
        %v249 = vpack.c.b16 %v243, %v242
        %v250 = vpack.c.b16 %v245, %v244
        %v251 = vpack.c.b16 %v247, %v246
        %vm256 = vcmask 523264
        %v258 = vsel %vm256, %v216, 0
        %260 = vmatprep.subr.bf16.mxu0 0
        %261 = vmatpush1.bf16.msra.mxu0 %v248
        %262 = vmatprep.subr.bf16.mxu0 0
        %263 = vmatpush1.bf16.msra.mxu0 %v249
        %264 = vmatprep.subr.bf16.mxu0 0
        %265 = vmatpush1.bf16.msra.mxu0 %v250
        %266 = vmatprep.subr.bf16.mxu0 0
        %267 = vmatpush1.bf16.msra.mxu0 %v251
        %268 = vmatprep.subr.bf16.mxu0 0
        %269 = vmatpush1.bf16.msra.mxu0 0
        %270 = vmatprep.subr.bf16.mxu0 0
        %271 = vmatpush1.bf16.msra.mxu0 0
        %272 = vmatprep.subr.bf16.mxu0 0
        %273 = vmatpush1.bf16.msra.mxu0 0
        %274 = vmatprep.subr.bf16.mxu0 0
        %275 = vmatpush1.bf16.msra.mxu0 0
        %276 = vmatprep.subr.bf16.mxu0 0
        %277 = vmatpush1.bf16.msra.mxu0 0
        %278 = vmatprep.subr.bf16.mxu0 0
        %279 = vmatpush1.bf16.msra.mxu0 0
        %280 = vmatprep.subr.bf16.mxu0 0
        %281 = vmatpush1.bf16.msra.mxu0 0
        %282 = vmatprep.subr.bf16.mxu0 0
        %283 = vmatpush1.bf16.msra.mxu0 0
        %284 = vmatprep.subr.bf16.mxu0 0
        %285 = vmatpush1.bf16.msra.mxu0 0
        %286 = vmatprep.subr.bf16.mxu0 0
        %287 = vmatpush1.bf16.msra.mxu0 0
        %288 = vmatprep.subr.bf16.mxu0 0
        %289 = vmatpush1.bf16.msra.mxu0 0
        %290 = vmatprep.subr.bf16.mxu0 0
        %291 = vmatpush1.bf16.msra.mxu0 0
        %292 = vmatprep.mubr.bf16.mxu0 0
        %293 = vmatmul.mubr.bf16.gmra.mrb[0].mxu0 %v258
        %v294 = vpop.f32.mrb[0].mxu0
        %v295 = vadd.f32 %v230, %v294
        %v296 = vpop.f32.mrb[0].mxu0
        %v297 = vpop.f32.mrb[0].mxu0
        %v298 = vpop.f32.mrb[0].mxu0
        %299 = vdwg.mxu0
        %300 = vst [vmem:[%s211] sm:$0x3] %v295
        %s301 = sand.u32 %s102, 1
        %s302 = scalar_lea.sflag [#allocation4], %s301
        %s303 = sand.u32 %s102, 1
        %s304 = smul.addr %s303, 2
        %s305 = scalar_lea.vmem [#allocation7], %s304
        // Predicated region
        $region41: #{tpu_custom_call.1} parent=31 // pred_check
          %p306 = pneg %p112
        $region42: #{tpu_custom_call.1} parent=31 // pred_check_branch
          %308 = sbr.rel (%p306) target = $region44
        $region43: #{tpu_custom_call.1} parent=31 // pred_region
          %s310 = ssub.s32 32, 32
          %311 = vsyncadd %s302, %s310
          %s312 = smul.addr %s21, 32
          %s313 = scalar_lea.hbm %s3, %s312
          %s315 = sshll.u32 %s305, 4
          %s316 = int_to_ptr.vmem [resolvable:$true] %s315
          %318 = dma.vmem_to_hbm [thread:$0]  %s316, 32, %s313, %s302
        $region44: #{tpu_custom_call.1} parent=31 // pred_fallthru
          _
      $region32: #{tpu_custom_call.1} parent=5 // pred_fallthru
        _
      %p319 = scmp.le.s32.totalorder 2, %s16
      // Predicated region
      $region45: #{tpu_custom_call.1} parent=5 // pred_check
        %p320 = pneg %p319
      $region46: #{tpu_custom_call.1} parent=5 // pred_check_branch
        %322 = sbr.rel (%p320) target = $region48
      $region47: #{tpu_custom_call.1} parent=5 // pred_region
        %s323 = ssub.s32 %s16, 2
        // Predicated region
        $region49: #{tpu_custom_call.1} parent=47 // pred_check
          %p324 = pneg %p118
        $region50: #{tpu_custom_call.1} parent=47 // pred_check_branch
          %326 = sbr.rel (%p324) target = $region52
        $region51: #{tpu_custom_call.1} parent=47 // pred_region
          %s327 = sand.u32 %s103, 1
          %s328 = scalar_lea.sflag [#allocation4], %s327
          %s329 = sand.u32 %s103, 1
          %s330 = smul.addr %s329, 2
          %s331 = scalar_lea.vmem [#allocation7], %s330
          %332 = dma.done %s328, 32
        $region52: #{tpu_custom_call.1} parent=47 // pred_fallthru
          _
      $region48: #{tpu_custom_call.1} parent=5 // pred_fallthru
        _
    $region6: #{tpu_custom_call.1} parent=1 // loop_footer
      %s20 = sadd.s32 1, %s16
    $region7: #{tpu_custom_call.1} parent=1 // loop_footer_branch
      %15 = sbr.rel target = $region3
    $region8: #{tpu_custom_call.1} parent=1 // loop_exit
      _
    %333 = vsyncpa [#allocation3], 1
    %s334 = scalar_lea.sflag [#allocation3], 1
    %335 = vsyncpa %s334, 1
    %336 = vsyncpa [#allocation6], 1
    %s337 = scalar_lea.sflag [#allocation6], 1
    %338 = vsyncpa %s337, 1
    %339 = vsyncpa [#allocation4], 1
    %s340 = scalar_lea.sflag [#allocation4], 1
    %341 = vsyncpa %s340, 1

</llo_original>
